<compile_context>
chip_gen: v7x
topology: tpu7x:2x2x1
jax: 0.10.0
libtpu: 0.0.40
codegen_flags: <defaults>
</compile_context>

<pallas_src>
import math
from functools import partial

import numpy as np
import jax
import jax.numpy as jnp
from jax.experimental import pallas as pl
from jax.experimental.pallas import tpu as pltpu


def _pad_kernel(x_ref, o_ref, *, pad: int, L: int):
    """x_ref: (L, tn) tile, o_ref: (L + 2*pad, tn) tile.

    Center is a straight VMEM copy; the 2*pad edge rows are negated copies of
    the corresponding interior rows (anti-reflection).  Pure data movement on
    lane-dense vregs; no MXU; bit-exact.
    """
    # Center: out[pad + l, :] = x[l, :]
    o_ref[pad:pad + L, :] = x_ref[...]
    # Edges (pad is small and static -> unrolled single-row copies).
    for j in range(pad):
        # front: out[j, :] = -x[pad - 1 - j, :]
        o_ref[j:j + 1, :] = -x_ref[pad - 1 - j:pad - j, :]
        # back:  out[pad + L + j, :] = -x[L - 1 - j, :]
        o_ref[pad + L + j:pad + L + j + 1, :] = -x_ref[L - 1 - j:L - j, :]


def _choose_lane_tile(N: int, L: int, Lout: int, itemsize: int) -> int:
    """Largest lane tile (multiple of 128, capped) whose double-buffered
    input+output blocks stay well under the scoped-VMEM budget (v7x-safe)."""
    budget = 24 * 1024 * 1024                  # headroom under 32 MiB scoped VMEM
    per_lane = 2 * (L + Lout) * itemsize       # double-buffered in + out column
    tn = max(128, (budget // per_lane) // 128 * 128)
    tn = min(tn, 2048)
    if N <= tn:
        return N                               # single lane block (full dim is legal)
    return tn


def anti_reflection_pad1d(x: jnp.ndarray, pad: int, axis: int = -1) -> jnp.ndarray:
    """Anti-reflection pad along `axis`: size grows from L to L + 2*pad."""
    if pad == 0:
        return x
    axis = axis % x.ndim
    L = x.shape[axis]
    if not 0 < pad <= L:
        raise ValueError(f"pad must satisfy 0 < pad <= L (got pad={pad}, L={L})")
    if not jnp.issubdtype(x.dtype, jnp.floating):
        raise TypeError(f"anti_reflection_pad1d expects a float dtype, got {x.dtype}")
    Lout = L + 2 * pad

    # Lane-dense layout: padded axis -> sublane axis, everything else flattened
    # onto the lane axis (wrapper-side layout plumbing only).
    xt = jnp.moveaxis(x, axis, 0)              # (L, ...)
    rest = xt.shape[1:]
    N = math.prod(rest) if rest else 1
    x2d = xt.reshape(L, N)

    itemsize = jnp.dtype(x.dtype).itemsize
    tn = _choose_lane_tile(N, L, Lout, itemsize)
    grid = (pl.cdiv(N, tn),)

    out2d = pl.pallas_call(
        partial(_pad_kernel, pad=pad, L=L),
        out_shape=jax.ShapeDtypeStruct((Lout, N), x.dtype),
        grid=grid,
        in_specs=[pl.BlockSpec((L, tn), lambda i: (0, i))],
        out_specs=pl.BlockSpec((Lout, tn), lambda i: (0, i)),
        compiler_params=pltpu.CompilerParams(
            dimension_semantics=("parallel",)),
        cost_estimate=pl.CostEstimate(
            flops=2 * pad * N,                             # negations only
            transcendentals=0,
            bytes_accessed=(L + Lout) * N * itemsize),
    )(x2d)

    out = out2d.reshape((Lout,) + rest)
    return jnp.moveaxis(out, 0, axis)


def anti_reflection_pad2d(y: jnp.ndarray, pad: int) -> jnp.ndarray:
    """dirichlet0 boundary handling inside ConvPropagator.forward:
    _antireflection_pad_1d(_antireflection_pad_1d(y, -1), -2)."""
    # TODO(synk): fuse this pad into the downstream DynamicConv2d
    # (unfold + matmul) consumer to avoid materializing the padded tensor in HBM.
    y = anti_reflection_pad1d(y, pad, axis=-1)
    y = anti_reflection_pad1d(y, pad, axis=-2)
    return y


def _reference_pad1d(x: jnp.ndarray, pad: int, axis: int = -1) -> jnp.ndarray:
    """Pure-JAX reference mirroring the PyTorch _antireflection_pad_1d."""
    xm = jnp.moveaxis(x, axis, -1)
    front = -jnp.flip(xm[..., :pad], axis=-1)
    back = -jnp.flip(xm[..., -pad:], axis=-1)
    out = jnp.concatenate([front, xm, back], axis=-1)
    return jnp.moveaxis(out, -1, axis)


if __name__ == "__main__":
    key = jax.random.PRNGKey(0)
    B, C, H, W = 2, 4, 16, 16
    nonlin_kernel_size, prop_layers = 5, 1
    nonlin_padding = (nonlin_kernel_size - 1) // 2
    pad = (2 + prop_layers) * nonlin_padding        # ConvPropagator.padding (dirichlet0) = 6

    y = jax.random.normal(key, (B, C, H, W), dtype=jnp.float32)

    # 1-D pad along the last axis (ConvPropagator._antireflection_pad_1d(y, -1)).
    out1 = jax.block_until_ready(anti_reflection_pad1d(y, pad, axis=-1))
    ref1 = _reference_pad1d(y, pad, axis=-1)
    assert out1.shape == (B, C, H, W + 2 * pad), out1.shape
    np.testing.assert_allclose(np.asarray(out1), np.asarray(ref1), rtol=0, atol=0)

    # Full dirichlet0 boundary pad (along -1 then -2) used inside the decoder loop.
    out2 = jax.block_until_ready(anti_reflection_pad2d(y, pad))
    ref2 = _reference_pad1d(_reference_pad1d(y, pad, axis=-1), pad, axis=-2)
    assert out2.shape == (B, C, H + 2 * pad, W + 2 * pad), out2.shape
    np.testing.assert_allclose(np.asarray(out2), np.asarray(ref2), rtol=0, atol=0)

    print("KERNEL_OK")
</pallas_src>

<mosaic_0001>
module attributes {stable_mosaic.version = 11 : i64} {
  func.func @_pad_kernel(%arg0: i32, %arg1: memref<16x128xf32, #tpu.memory_space<vmem>>, %arg2: memref<28x128xf32, #tpu.memory_space<vmem>>) attributes {dimension_semantics = [#tpu.dimension_semantics<parallel>], iteration_bounds = array<i64: 1>, scalar_prefetch = 0 : i64, scratch_operands = 0 : i64, tpu.core_type = #tpu.core_type<tc>, window_params = [{transform_indices = @transform_0, window_bounds = array<i64: 16, 128>}, {transform_indices = @transform_1, window_bounds = array<i64: 28, 128>}]} {
    %c0 = arith.constant 0 : index
    %c0_0 = arith.constant 0 : index
    %0 = vector.load %arg1[%c0, %c0_0] : memref<16x128xf32, #tpu.memory_space<vmem>>, vector<16x128xf32>
    %c6 = arith.constant 6 : index
    %c0_1 = arith.constant 0 : index
    %1 = vector.load %arg2[%c6, %c0_1] : memref<28x128xf32, #tpu.memory_space<vmem>>, vector<16x128xf32>
    tpu.vector_store %arg2[%c6, %c0_1], %0 {strides = array<i32>} : memref<28x128xf32, #tpu.memory_space<vmem>>, vector<16x128xf32>,
    %c5 = arith.constant 5 : index
    %c0_2 = arith.constant 0 : index
    %2 = vector.load %arg1[%c5, %c0_2] : memref<16x128xf32, #tpu.memory_space<vmem>>, vector<1x128xf32>
    %cst = arith.constant 0.000000e+00 : f32
    %3 = vector.broadcast %cst : f32 to vector<1x128xf32>
    %4 = arith.subf %3, %2 : vector<1x128xf32>
    %c0_3 = arith.constant 0 : index
    %c0_4 = arith.constant 0 : index
    %5 = vector.load %arg2[%c0_3, %c0_4] : memref<28x128xf32, #tpu.memory_space<vmem>>, vector<1x128xf32>
    tpu.vector_store %arg2[%c0_3, %c0_4], %4 {strides = array<i32>} : memref<28x128xf32, #tpu.memory_space<vmem>>, vector<1x128xf32>,
    %c15 = arith.constant 15 : index
    %c0_5 = arith.constant 0 : index
    %6 = vector.load %arg1[%c15, %c0_5] : memref<16x128xf32, #tpu.memory_space<vmem>>, vector<1x128xf32>
    %cst_6 = arith.constant 0.000000e+00 : f32
    %7 = vector.broadcast %cst_6 : f32 to vector<1x128xf32>
    %8 = arith.subf %7, %6 : vector<1x128xf32>
    %c22 = arith.constant 22 : index
    %c0_7 = arith.constant 0 : index
    %9 = vector.load %arg2[%c22, %c0_7] : memref<28x128xf32, #tpu.memory_space<vmem>>, vector<1x128xf32>
    tpu.vector_store %arg2[%c22, %c0_7], %8 {strides = array<i32>} : memref<28x128xf32, #tpu.memory_space<vmem>>, vector<1x128xf32>,
    %c4 = arith.constant 4 : index
    %c0_8 = arith.constant 0 : index
    %10 = vector.load %arg1[%c4, %c0_8] : memref<16x128xf32, #tpu.memory_space<vmem>>, vector<1x128xf32>
    %cst_9 = arith.constant 0.000000e+00 : f32
    %11 = vector.broadcast %cst_9 : f32 to vector<1x128xf32>
    %12 = arith.subf %11, %10 : vector<1x128xf32>
    %c1 = arith.constant 1 : index
    %c0_10 = arith.constant 0 : index
    %13 = vector.load %arg2[%c1, %c0_10] : memref<28x128xf32, #tpu.memory_space<vmem>>, vector<1x128xf32>
    tpu.vector_store %arg2[%c1, %c0_10], %12 {strides = array<i32>} : memref<28x128xf32, #tpu.memory_space<vmem>>, vector<1x128xf32>,
    %c14 = arith.constant 14 : index
    %c0_11 = arith.constant 0 : index
    %14 = vector.load %arg1[%c14, %c0_11] : memref<16x128xf32, #tpu.memory_space<vmem>>, vector<1x128xf32>
    %cst_12 = arith.constant 0.000000e+00 : f32
    %15 = vector.broadcast %cst_12 : f32 to vector<1x128xf32>
    %16 = arith.subf %15, %14 : vector<1x128xf32>
    %c23 = arith.constant 23 : index
    %c0_13 = arith.constant 0 : index
    %17 = vector.load %arg2[%c23, %c0_13] : memref<28x128xf32, #tpu.memory_space<vmem>>, vector<1x128xf32>
    tpu.vector_store %arg2[%c23, %c0_13], %16 {strides = array<i32>} : memref<28x128xf32, #tpu.memory_space<vmem>>, vector<1x128xf32>,
    %c3 = arith.constant 3 : index
    %c0_14 = arith.constant 0 : index
    %18 = vector.load %arg1[%c3, %c0_14] : memref<16x128xf32, #tpu.memory_space<vmem>>, vector<1x128xf32>
    %cst_15 = arith.constant 0.000000e+00 : f32
    %19 = vector.broadcast %cst_15 : f32 to vector<1x128xf32>
    %20 = arith.subf %19, %18 : vector<1x128xf32>
    %c2 = arith.constant 2 : index
    %c0_16 = arith.constant 0 : index
    %21 = vector.load %arg2[%c2, %c0_16] : memref<28x128xf32, #tpu.memory_space<vmem>>, vector<1x128xf32>
    tpu.vector_store %arg2[%c2, %c0_16], %20 {strides = array<i32>} : memref<28x128xf32, #tpu.memory_space<vmem>>, vector<1x128xf32>,
    %c13 = arith.constant 13 : index
    %c0_17 = arith.constant 0 : index
    %22 = vector.load %arg1[%c13, %c0_17] : memref<16x128xf32, #tpu.memory_space<vmem>>, vector<1x128xf32>
    %cst_18 = arith.constant 0.000000e+00 : f32
    %23 = vector.broadcast %cst_18 : f32 to vector<1x128xf32>
    %24 = arith.subf %23, %22 : vector<1x128xf32>
    %c24 = arith.constant 24 : index
    %c0_19 = arith.constant 0 : index
    %25 = vector.load %arg2[%c24, %c0_19] : memref<28x128xf32, #tpu.memory_space<vmem>>, vector<1x128xf32>
    tpu.vector_store %arg2[%c24, %c0_19], %24 {strides = array<i32>} : memref<28x128xf32, #tpu.memory_space<vmem>>, vector<1x128xf32>,
    %c2_20 = arith.constant 2 : index
    %c0_21 = arith.constant 0 : index
    %26 = vector.load %arg1[%c2_20, %c0_21] : memref<16x128xf32, #tpu.memory_space<vmem>>, vector<1x128xf32>
    %cst_22 = arith.constant 0.000000e+00 : f32
    %27 = vector.broadcast %cst_22 : f32 to vector<1x128xf32>
    %28 = arith.subf %27, %26 : vector<1x128xf32>
    %c3_23 = arith.constant 3 : index
    %c0_24 = arith.constant 0 : index
    %29 = vector.load %arg2[%c3_23, %c0_24] : memref<28x128xf32, #tpu.memory_space<vmem>>, vector<1x128xf32>
    tpu.vector_store %arg2[%c3_23, %c0_24], %28 {strides = array<i32>} : memref<28x128xf32, #tpu.memory_space<vmem>>, vector<1x128xf32>,
    %c12 = arith.constant 12 : index
    %c0_25 = arith.constant 0 : index
    %30 = vector.load %arg1[%c12, %c0_25] : memref<16x128xf32, #tpu.memory_space<vmem>>, vector<1x128xf32>
    %cst_26 = arith.constant 0.000000e+00 : f32
    %31 = vector.broadcast %cst_26 : f32 to vector<1x128xf32>
    %32 = arith.subf %31, %30 : vector<1x128xf32>
    %c25 = arith.constant 25 : index
    %c0_27 = arith.constant 0 : index
    %33 = vector.load %arg2[%c25, %c0_27] : memref<28x128xf32, #tpu.memory_space<vmem>>, vector<1x128xf32>
    tpu.vector_store %arg2[%c25, %c0_27], %32 {strides = array<i32>} : memref<28x128xf32, #tpu.memory_space<vmem>>, vector<1x128xf32>,
    %c1_28 = arith.constant 1 : index
    %c0_29 = arith.constant 0 : index
    %34 = vector.load %arg1[%c1_28, %c0_29] : memref<16x128xf32, #tpu.memory_space<vmem>>, vector<1x128xf32>
    %cst_30 = arith.constant 0.000000e+00 : f32
    %35 = vector.broadcast %cst_30 : f32 to vector<1x128xf32>
    %36 = arith.subf %35, %34 : vector<1x128xf32>
    %c4_31 = arith.constant 4 : index
    %c0_32 = arith.constant 0 : index
    %37 = vector.load %arg2[%c4_31, %c0_32] : memref<28x128xf32, #tpu.memory_space<vmem>>, vector<1x128xf32>
    tpu.vector_store %arg2[%c4_31, %c0_32], %36 {strides = array<i32>} : memref<28x128xf32, #tpu.memory_space<vmem>>, vector<1x128xf32>,
    %c11 = arith.constant 11 : index
    %c0_33 = arith.constant 0 : index
    %38 = vector.load %arg1[%c11, %c0_33] : memref<16x128xf32, #tpu.memory_space<vmem>>, vector<1x128xf32>
    %cst_34 = arith.constant 0.000000e+00 : f32
    %39 = vector.broadcast %cst_34 : f32 to vector<1x128xf32>
    %40 = arith.subf %39, %38 : vector<1x128xf32>
    %c26 = arith.constant 26 : index
    %c0_35 = arith.constant 0 : index
    %41 = vector.load %arg2[%c26, %c0_35] : memref<28x128xf32, #tpu.memory_space<vmem>>, vector<1x128xf32>
    tpu.vector_store %arg2[%c26, %c0_35], %40 {strides = array<i32>} : memref<28x128xf32, #tpu.memory_space<vmem>>, vector<1x128xf32>,
    %c0_36 = arith.constant 0 : index
    %c0_37 = arith.constant 0 : index
    %42 = vector.load %arg1[%c0_36, %c0_37] : memref<16x128xf32, #tpu.memory_space<vmem>>, vector<1x128xf32>
    %cst_38 = arith.constant 0.000000e+00 : f32
    %43 = vector.broadcast %cst_38 : f32 to vector<1x128xf32>
    %44 = arith.subf %43, %42 : vector<1x128xf32>
    %c5_39 = arith.constant 5 : index
    %c0_40 = arith.constant 0 : index
    %45 = vector.load %arg2[%c5_39, %c0_40] : memref<28x128xf32, #tpu.memory_space<vmem>>, vector<1x128xf32>
    tpu.vector_store %arg2[%c5_39, %c0_40], %44 {strides = array<i32>} : memref<28x128xf32, #tpu.memory_space<vmem>>, vector<1x128xf32>,
    %c10 = arith.constant 10 : index
    %c0_41 = arith.constant 0 : index
    %46 = vector.load %arg1[%c10, %c0_41] : memref<16x128xf32, #tpu.memory_space<vmem>>, vector<1x128xf32>
    %cst_42 = arith.constant 0.000000e+00 : f32
    %47 = vector.broadcast %cst_42 : f32 to vector<1x128xf32>
    %48 = arith.subf %47, %46 : vector<1x128xf32>
    %c27 = arith.constant 27 : index
    %c0_43 = arith.constant 0 : index
    %49 = vector.load %arg2[%c27, %c0_43] : memref<28x128xf32, #tpu.memory_space<vmem>>, vector<1x128xf32>
    tpu.vector_store %arg2[%c27, %c0_43], %48 {strides = array<i32>} : memref<28x128xf32, #tpu.memory_space<vmem>>, vector<1x128xf32>,
    return
  }
  func.func @transform_0(%arg0: i32) -> (i32, i32) {
    %c0_i32 = arith.constant 0 : i32
    %c0_i32_0 = arith.constant 0 : i32
    return %c0_i32, %arg0 : i32, i32
  }
  func.func @transform_1(%arg0: i32) -> (i32, i32) {
    %c0_i32 = arith.constant 0 : i32
    %c0_i32_0 = arith.constant 0 : i32
    return %c0_i32, %arg0 : i32, i32
  }
}

</mosaic_0001>

<llo_original>
// kernel: tpu_custom_call.1
$region0: #{tpu_custom_call.1}
  #allocation0 [shape = 'u32[]', space=smem, size = 0x4, offset = 0x4, fixed_abs, tag = 'smem constant byte address 0x4 - core index']
  #allocation1 [shape = 'u32[144,128]{1,0:T(1,128)}', space=vmem, size = 0x12000, scoped, tag = 'internal scratch']
  %s0 = inlined_call_operand.hbm [shape: f32[16,128], index: 0, kind: input, shape index: {}]
  %s1 = inlined_call_operand.hbm [shape: f32[28,128], index: 1, kind: output, shape index: {}]
  %s2 = sld [smem:[#allocation0]]
  $region18: #{tpu_custom_call.1} parent=0
    _
  %s4 = ssub.s32 1, %s2
  %s5 = scalar_select 0, %s4, %s2
  $region1: #{tpu_custom_call.1} parent=0
    #allocation2 [shape = 'u8[8192]{0}', space=vmem, size = 0x2000, scoped, tag = 'input window, operand 0, single buffered']
    #allocation3 [shape = 's32[1]{0}', space=sflag, size = 0x4, scoped, tag = 'scoped memory for tpu_custom_call.1']
    #allocation4 [shape = 's32[1]{0}', space=sflag, size = 0x4, scoped, tag = 'scoped memory for tpu_custom_call.1']
    #allocation5 [shape = 'u8[16384]{0}', space=vmem, size = 0x4000, scoped, tag = 'output window, operand 0, single buffered']
    %6 = vsyncpa [#allocation3], 0
    %7 = vsyncpa [#allocation4], 0
    // Predicated region
    $region2: #{tpu_custom_call.1} parent=1 // pred_check
      _
    $region3: #{tpu_custom_call.1} parent=1 // pred_check_branch
      %9 = sbr.rel (0) target = $region5
    $region4: #{tpu_custom_call.1} parent=1 // pred_region
      %s11 = ssub.s32 256, 256
      %12 = vsyncadd [#allocation3], %s11
      %s13 = sshll.u32 [#allocation2], 4
      %s14 = int_to_ptr.vmem [resolvable:$true] %s13
      %19 = dma.hbm_to_vmem [thread:$0]  %s0, 256, %s14, [#allocation3], 128, 128, 8
    $region5: #{tpu_custom_call.1} parent=1 // pred_fallthru
      _
    // Predicated region
    $region6: #{tpu_custom_call.1} parent=1 // pred_check
      _
    $region7: #{tpu_custom_call.1} parent=1 // pred_check_branch
      %21 = sbr.rel (0) target = $region9
    $region8: #{tpu_custom_call.1} parent=1 // pred_region
      %22 = dma.done [#allocation3], 256
    $region9: #{tpu_custom_call.1} parent=1 // pred_fallthru
      _
    %v23 = vld [vmem:[#allocation2] sm:$0xff]
    %v24 = vld [vmem:[#allocation2 + $0x8] sm:$0xff]
    %25 = vst [vmem:[#allocation5 + $0x6] sm:$0xff] %v23
    %26 = vst [vmem:[#allocation5 + $0xe] sm:$0xff] %v24
    %v27 = vld [vmem:[#allocation2 + $0x5] sm:$0x1]
    %v28 = vsub.f32 0.0, %v27
    %29 = vst [vmem:[#allocation5] sm:$0x1] %v28
    %v30 = vld [vmem:[#allocation2 + $0xf] sm:$0x1]
    %v31 = vsub.f32 0.0, %v30
    %32 = vst [vmem:[#allocation5 + $0x16] sm:$0x1] %v31
    %v33 = vld [vmem:[#allocation2 + $0x4] sm:$0x1]
    %v34 = vsub.f32 0.0, %v33
    %35 = vst [vmem:[#allocation5 + $0x1] sm:$0x1] %v34
    %v36 = vld [vmem:[#allocation2 + $0xe] sm:$0x1]
    %v37 = vsub.f32 0.0, %v36
    %38 = vst [vmem:[#allocation5 + $0x17] sm:$0x1] %v37
    %v39 = vld [vmem:[#allocation2 + $0x3] sm:$0x1]
    %v40 = vsub.f32 0.0, %v39
    %41 = vst [vmem:[#allocation5 + $0x2] sm:$0x1] %v40
    %v42 = vld [vmem:[#allocation2 + $0xd] sm:$0x1]
    %v43 = vsub.f32 0.0, %v42
    %44 = vst [vmem:[#allocation5 + $0x18] sm:$0x1] %v43
    %v45 = vld [vmem:[#allocation2 + $0x2] sm:$0x1]
    %v46 = vsub.f32 0.0, %v45
    %47 = vst [vmem:[#allocation5 + $0x3] sm:$0x1] %v46
    %v48 = vld [vmem:[#allocation2 + $0xc] sm:$0x1]
    %v49 = vsub.f32 0.0, %v48
    %50 = vst [vmem:[#allocation5 + $0x19] sm:$0x1] %v49
    %v51 = vld [vmem:[#allocation2 + $0x1] sm:$0x1]
    %v52 = vsub.f32 0.0, %v51
    %53 = vst [vmem:[#allocation5 + $0x4] sm:$0x1] %v52
    %v54 = vld [vmem:[#allocation2 + $0xb] sm:$0x1]
    %v55 = vsub.f32 0.0, %v54
    %56 = vst [vmem:[#allocation5 + $0x1a] sm:$0x1] %v55
    %v57 = vld [vmem:[#allocation2] sm:$0x1]
    %v58 = vsub.f32 0.0, %v57
    %59 = vst [vmem:[#allocation5 + $0x5] sm:$0x1] %v58
    %v60 = vld [vmem:[#allocation2 + $0xa] sm:$0x1]
    %v61 = vsub.f32 0.0, %v60
    %62 = vst [vmem:[#allocation5 + $0x1b] sm:$0x1] %v61
    // Predicated region
    $region10: #{tpu_custom_call.1} parent=1 // pred_check
      _
    $region11: #{tpu_custom_call.1} parent=1 // pred_check_branch
      %64 = sbr.rel (0) target = $region13
    $region12: #{tpu_custom_call.1} parent=1 // pred_region
      %s66 = ssub.s32 512, 512
      %67 = vsyncadd [#allocation4], %s66
      %s68 = sshll.u32 [#allocation5], 4
      %s69 = int_to_ptr.vmem [resolvable:$true] %s68
      %74 = dma.vmem_to_hbm [thread:$0]  %s69, 512, %s1, [#allocation4], 128, 128, 8
    $region13: #{tpu_custom_call.1} parent=1 // pred_fallthru
      _
    // Predicated region
    $region14: #{tpu_custom_call.1} parent=1 // pred_check
      _
    $region15: #{tpu_custom_call.1} parent=1 // pred_check_branch
      %76 = sbr.rel (0) target = $region17
    $region16: #{tpu_custom_call.1} parent=1 // pred_region
      %77 = dma.done [#allocation4], 512
    $region17: #{tpu_custom_call.1} parent=1 // pred_fallthru
      _
    %78 = vsyncpa [#allocation3], 1
    %79 = vsyncpa [#allocation4], 1

</llo_original>
